<compile_context>
chip_gen: v7x
topology: tpu7x:2x2x1
jax: 0.10.0
libtpu: 0.0.40
codegen_flags: <defaults>
</compile_context>

<pallas_src>
import numpy as np

import jax
import jax.numpy as jnp
from jax.experimental import pallas as pl
from jax.experimental.pallas import tpu as pltpu


# ------------------------------ fused kernel -------------------------------- #

def _siamese_embed_kernel(lhs1_ref, wt1_ref, b1_ref, wt2_ref, b2_ref,
                          w3_ref, b3_ref, w4_ref, b4_ref,
                          out_ref, a1_buf, a2_buf, p2_buf):
    """Whole embedding net (conv1..fc2) for the merged 2n-image batch.

    Activation layout is lane-dense throughout: (rows, 128) f32 slabs with
    rows = (batch, y) and lane = x*C + c.
    """
    f32, bf16 = jnp.float32, jnp.bfloat16
    nb = out_ref.shape[0]                      # merged batch (both branches)

    # ---- conv1 + ReLU: one block-Toeplitz GEMM, K = 3 padded input rows x 128.
    # LHS was built wrapper-side.  Output lane = x*8 + c (x 0..15, c 0..7).
    a1 = jnp.dot(lhs1_ref[...], wt1_ref[...], preferred_element_type=f32)
    a1_buf[...] = jnp.maximum(a1 + b1_ref[...], 0.0)                  # (nb*16, 128)

    # ---- maxpool1 (2x2 / stride 2).  y-pairs: adjacent rows via stride-2 reads;
    # x-pairs: lanes 8 apart via a lane rotation.  The pooled value stays at the
    # even-x lane; odd-x lanes become don't-care and hit zero rows of wt2.
    ym1 = jnp.maximum(a1_buf[pl.ds(0, nb * 8, stride=2), :],
                      a1_buf[pl.ds(1, nb * 8, stride=2), :])          # (nb*8, 128)
    p1 = jnp.maximum(ym1, jnp.concatenate([ym1[:, 8:], ym1[:, :8]], axis=1))

    # ---- conv2 + ReLU: block-Toeplitz GEMM on the pooled map.  SAME y-padding
    # is two explicit zero rows; x-padding and the even-x-lane input layout are
    # folded into wt2.  Output lane = x*16 + c (x 0..7, c 0..15).
    zrow = jnp.zeros((nb, 1, 128), f32)
    p1m = jnp.concatenate([zrow, p1.reshape(nb, 8, 128), zrow], axis=1)  # (nb,10,128)
    lhs2 = jnp.concatenate([p1m[:, dy:dy + 8, :] for dy in range(3)],
                           axis=-1).reshape(nb * 8, 3 * 128)             # (nb*8, 384)
    a2 = jnp.dot(lhs2.astype(bf16), wt2_ref[...], preferred_element_type=f32)
    a2_buf[...] = jnp.maximum(a2 + b2_ref[...], 0.0)                  # (nb*8, 128)

    # ---- maxpool2 (same scheme; x-pairs are 16 lanes apart).
    ym2 = jnp.maximum(a2_buf[pl.ds(0, nb * 4, stride=2), :],
                      a2_buf[pl.ds(1, nb * 4, stride=2), :])          # (nb*4, 128)
    p2_buf[...] = jnp.maximum(
        ym2, jnp.concatenate([ym2[:, 16:], ym2[:, :16]], axis=1))

    # ---- fc1 + ReLU: regroup (batch, y2) rows into batch rows with y2 folded
    # into K (stride-4 row reads, lane-block-aligned concat), then one K=512
    # GEMM.  PyTorch's NCHW flatten order and the don't-care (odd-x) lanes are
    # folded into w3's row packing (zero rows for unused lanes).
    lhs3 = jnp.concatenate(
        [p2_buf[pl.ds(y2, nb, stride=4), :] for y2 in range(4)], axis=1)  # (nb, 512)
    z1 = jnp.dot(lhs3.astype(bf16), w3_ref[...], preferred_element_type=f32)
    z1 = jnp.maximum(z1 + b3_ref[...], 0.0)                           # (nb, 64)

    # ---- fc2
    z2 = jnp.dot(z1.astype(bf16), w4_ref[...], preferred_element_type=f32)
    out_ref[...] = (z2 + b4_ref[...]).astype(out_ref.dtype)           # (nb, 32)


# --------------------------- params & preparation --------------------------- #

def init_params(key):
    ks = jax.random.split(key, 8)
    return {
        "conv1_w": 0.1 * jax.random.normal(ks[0], (8, 4, 3, 3), jnp.float32),
        "conv1_b": 0.1 * jax.random.normal(ks[1], (8,), jnp.float32),
        "conv2_w": 0.1 * jax.random.normal(ks[2], (16, 8, 3, 3), jnp.float32),
        "conv2_b": 0.1 * jax.random.normal(ks[3], (16,), jnp.float32),
        "fc1_w": 0.1 * jax.random.normal(ks[4], (16 * 4 * 4, 64), jnp.float32),
        "fc1_b": 0.1 * jax.random.normal(ks[5], (64,), jnp.float32),
        "fc2_w": 0.1 * jax.random.normal(ks[6], (64, 32), jnp.float32),
        "fc2_b": 0.1 * jax.random.normal(ks[7], (32,), jnp.float32),
    }


def prepare_params(params):
    """One-time host-side repack of the weights into kernel-friendly form."""
    w1 = np.asarray(params["conv1_w"], np.float32)   # (8, 4, 3, 3)  OIHW
    w2 = np.asarray(params["conv2_w"], np.float32)   # (16, 8, 3, 3)
    fc1 = np.asarray(params["fc1_w"], np.float32)    # (256, 64)

    # conv1 block-Toeplitz weight: row = dy*128 + x_in*4 + cin  (input lane),
    # col = x_out*8 + cout; SAME x-padding == absent rows (left zero).
    wt1 = np.zeros((3 * 128, 128), np.float32)
    for dy in range(3):
        for dx in range(3):
            tap = w1[:, :, dy, dx].T                 # (cin=4, cout=8)
            for xo in range(16):
                xi = xo + dx - 1
                if 0 <= xi < 16:
                    wt1[dy * 128 + xi * 4: dy * 128 + xi * 4 + 4,
                        xo * 8: xo * 8 + 8] = tap

    # conv2 block-Toeplitz weight: input lives at the even-x lanes of the pooled
    # map (lane = (2*xi)*8 + cin); col = x_out*16 + cout.  Odd-x lanes -> zero rows.
    wt2 = np.zeros((3 * 128, 128), np.float32)
    for dy in range(3):
        for dx in range(3):
            tap = w2[:, :, dy, dx].T                 # (cin=8, cout=16)
            for xo in range(8):
                xi = xo + dx - 1
                if 0 <= xi < 8:
                    wt2[dy * 128 + (2 * xi) * 8: dy * 128 + (2 * xi) * 8 + 8,
                        xo * 16: xo * 16 + 16] = tap

    # fc1 weight repacked for the kernel's (batch, 512) layout:
    # lane = y2*128 + (2*x2)*16 + c   <-   PyTorch NCHW flatten index c*16+y2*4+x2.
    w3 = np.zeros((512, 64), np.float32)
    for c in range(16):
        for y2 in range(4):
            for x2 in range(4):
                w3[y2 * 128 + (2 * x2) * 16 + c, :] = fc1[c * 16 + y2 * 4 + x2, :]

    return {
        "wt1": jnp.asarray(wt1, jnp.bfloat16),
        "b1": jnp.asarray(np.tile(np.asarray(params["conv1_b"], np.float32),
                                  16).reshape(1, 128)),
        "wt2": jnp.asarray(wt2, jnp.bfloat16),
        "b2": jnp.asarray(np.tile(np.asarray(params["conv2_b"], np.float32),
                                  8).reshape(1, 128)),
        "w3": jnp.asarray(w3, jnp.bfloat16),
        "b3": jnp.asarray(np.asarray(params["fc1_b"], np.float32).reshape(1, 64)),
        "w4": jnp.asarray(np.asarray(params["fc2_w"], np.float32), jnp.bfloat16),
        "b4": jnp.asarray(np.asarray(params["fc2_b"], np.float32).reshape(1, 32)),
    }


# ------------------------------ Siamese forward ------------------------------ #

def face_siamese_net(prep, x1, x2):
    """FaceSiameseNet.forward: shared-weight embeddings of both inputs, 1 kernel."""
    assert x1.shape == x2.shape and x1.shape[1:] == (4, 16, 16)
    n = x1.shape[0]
    nb = 2 * n

    # Wrapper-side layout plumbing (free XLA work): NCHW -> NHWC, fold W*Cin into
    # a 128-lane row (lanes 64..127 zero), SAME y-padding, and conv1's
    # block-Toeplitz LHS (3 stacked row-windows), already cast to bf16.
    x = jnp.concatenate([x1, x2], axis=0)                          # (nb, 4, 16, 16)
    x = jnp.transpose(x, (0, 2, 3, 1)).astype(jnp.float32)         # (nb, 16, 16, 4)
    x = jnp.pad(x.reshape(nb, 16, 64), ((0, 0), (1, 1), (0, 64)))  # (nb, 18, 128)
    lhs1 = jnp.concatenate([x[:, dy:dy + 16, :] for dy in range(3)], axis=-1)
    lhs1 = lhs1.reshape(nb * 16, 3 * 128).astype(jnp.bfloat16)     # (nb*16, 384)

    out = pl.pallas_call(
        _siamese_embed_kernel,
        out_shape=jax.ShapeDtypeStruct((nb, 32), jnp.float32),
        scratch_shapes=[pltpu.VMEM((nb * 16, 128), jnp.float32),   # conv1 act
                        pltpu.VMEM((nb * 8, 128), jnp.float32),    # conv2 act
                        pltpu.VMEM((nb * 4, 128), jnp.float32)],   # pool2 out
    )(lhs1, prep["wt1"], prep["b1"], prep["wt2"], prep["b2"],
      prep["w3"], prep["b3"], prep["w4"], prep["b4"])
    return out[:n], out[n:]


# ------------------------- pure-JAX reference (check) ------------------------ #

def _reference_embed(params, x_nchw):
    """Reference at the same precision convention (bf16 matmul operands, f32 acc)."""
    def mm(a, b):
        return jnp.dot(a.astype(jnp.bfloat16), b.astype(jnp.bfloat16),
                       preferred_element_type=jnp.float32)

    def conv3x3_relu(x, w_oihw, b):
        n, h, wd, c = x.shape
        oc = w_oihw.shape[0]
        xp = jnp.pad(x, ((0, 0), (1, 1), (1, 1), (0, 0)))
        cols = jnp.concatenate(
            [xp[:, i:i + h, j:j + wd, :] for i in range(3) for j in range(3)],
            axis=-1).reshape(n * h * wd, 9 * c)
        wm = jnp.transpose(w_oihw, (2, 3, 1, 0)).reshape(9 * c, oc)
        y = mm(cols, wm) + b
        return jnp.maximum(y, 0.0).reshape(n, h, wd, oc)

    def pool(x):
        n, h, wd, c = x.shape
        return x.reshape(n, h // 2, 2, wd // 2, 2, c).max(axis=(2, 4))

    x = jnp.transpose(x_nchw, (0, 2, 3, 1)).astype(jnp.float32)
    x = pool(conv3x3_relu(x, params["conv1_w"], params["conv1_b"]))
    x = pool(conv3x3_relu(x, params["conv2_w"], params["conv2_b"]))
    n = x.shape[0]
    x = jnp.transpose(x, (0, 3, 1, 2)).reshape(n, -1)           # PyTorch NCHW flatten
    x = jnp.maximum(mm(x, params["fc1_w"]) + params["fc1_b"], 0.0)
    return mm(x, params["fc2_w"]) + params["fc2_b"]


# ---------------------------------- main ------------------------------------ #

if __name__ == "__main__":
    key = jax.random.PRNGKey(0)
    k_p, k_x1, k_x2 = jax.random.split(key, 3)
    params = init_params(k_p)
    prep = prepare_params(params)

    # Small face-image pair: batch=2, channels=4, spatial=16x16 (NCHW).
    x1 = jax.random.normal(k_x1, (2, 4, 16, 16), jnp.float32)
    x2 = jax.random.normal(k_x2, (2, 4, 16, 16), jnp.float32)

    fwd = jax.jit(face_siamese_net)
    emb1, emb2 = fwd(prep, x1, x2)
    jax.block_until_ready((emb1, emb2))

    assert emb1.shape == (2, 32) and emb2.shape == (2, 32)
    assert emb1.dtype == jnp.float32 and emb2.dtype == jnp.float32

    # Correctness check against a pure-JAX reference at matching precision.
    ref1 = np.asarray(_reference_embed(params, x1))
    ref2 = np.asarray(_reference_embed(params, x2))
    np.testing.assert_allclose(np.asarray(emb1), ref1, rtol=2e-2, atol=2e-2)
    np.testing.assert_allclose(np.asarray(emb2), ref2, rtol=2e-2, atol=2e-2)

    print("KERNEL_OK")
</pallas_src>

<mosaic_0001>
module attributes {stable_mosaic.version = 11 : i64} {
  func.func @_siamese_embed_kernel(%arg0: memref<64x384xbf16, #tpu.memory_space<vmem>>, %arg1: memref<384x128xbf16, #tpu.memory_space<vmem>>, %arg2: memref<1x128xf32, #tpu.memory_space<vmem>>, %arg3: memref<384x128xbf16, #tpu.memory_space<vmem>>, %arg4: memref<1x128xf32, #tpu.memory_space<vmem>>, %arg5: memref<512x64xbf16, #tpu.memory_space<vmem>>, %arg6: memref<1x64xf32, #tpu.memory_space<vmem>>, %arg7: memref<64x32xbf16, #tpu.memory_space<vmem>>, %arg8: memref<1x32xf32, #tpu.memory_space<vmem>>, %arg9: memref<4x32xf32, #tpu.memory_space<vmem>>, %arg10: memref<64x128xf32, #tpu.memory_space<vmem>>, %arg11: memref<32x128xf32, #tpu.memory_space<vmem>>, %arg12: memref<16x128xf32, #tpu.memory_space<vmem>>) attributes {dimension_semantics = [], scalar_prefetch = 0 : i64, scratch_operands = 3 : i64, tpu.core_type = #tpu.core_type<tc>} {
    %c0 = arith.constant 0 : index
    %c0_0 = arith.constant 0 : index
    %0 = vector.load %arg0[%c0, %c0_0] : memref<64x384xbf16, #tpu.memory_space<vmem>>, vector<64x384xbf16>
    %c0_1 = arith.constant 0 : index
    %c0_2 = arith.constant 0 : index
    %1 = vector.load %arg1[%c0_1, %c0_2] : memref<384x128xbf16, #tpu.memory_space<vmem>>, vector<384x128xbf16>
    %cst = arith.constant dense<0.000000e+00> : vector<64x128xf32>
    %2 = tpu.matmul %0, %1, %cst {dimension_numbers = #tpu.dot_dimension_numbers<[1], [0], [0], [1], [0, 0, 1, 1], [], []>} : vector<64x384xbf16>, vector<384x128xbf16>, vector<64x128xf32> -> vector<64x128xf32>
    %c0_3 = arith.constant 0 : index
    %c0_4 = arith.constant 0 : index
    %3 = vector.load %arg2[%c0_3, %c0_4] : memref<1x128xf32, #tpu.memory_space<vmem>>, vector<1x128xf32>
    %4 = vector.broadcast %3 : vector<1x128xf32> to vector<64x128xf32>
    %5 = arith.addf %2, %4 : vector<64x128xf32>
    %cst_5 = arith.constant 0.000000e+00 : f32
    %6 = vector.broadcast %cst_5 : f32 to vector<64x128xf32>
    %7 = arith.maximumf %5, %6 : vector<64x128xf32>
    %c0_6 = arith.constant 0 : index
    %c0_7 = arith.constant 0 : index
    %8 = vector.load %arg10[%c0_6, %c0_7] : memref<64x128xf32, #tpu.memory_space<vmem>>, vector<64x128xf32>
    tpu.vector_store %arg10[%c0_6, %c0_7], %7 {strides = array<i32>} : memref<64x128xf32, #tpu.memory_space<vmem>>, vector<64x128xf32>,
    %c0_8 = arith.constant 0 : index
    %c0_9 = arith.constant 0 : index
    %9 = tpu.strided_load %arg10[%c0_8, %c0_9] {strides = array<i32: 2, 1>} : memref<64x128xf32, #tpu.memory_space<vmem>>, vector<32x128xf32>
    %c1 = arith.constant 1 : index
    %c0_10 = arith.constant 0 : index
    %10 = tpu.strided_load %arg10[%c1, %c0_10] {strides = array<i32: 2, 1>} : memref<64x128xf32, #tpu.memory_space<vmem>>, vector<32x128xf32>
    %11 = arith.maximumf %9, %10 : vector<32x128xf32>
    %12 = vector.extract_strided_slice %11 {offsets = [0, 8], sizes = [32, 120], strides = [1, 1]} : vector<32x128xf32> to vector<32x120xf32>
    %13 = vector.extract_strided_slice %11 {offsets = [0, 0], sizes = [32, 8], strides = [1, 1]} : vector<32x128xf32> to vector<32x8xf32>
    %14 = tpu.concatenate %12, %13 in 1 : vector<32x120xf32>, vector<32x8xf32> -> vector<32x128xf32>
    %15 = arith.maximumf %11, %14 : vector<32x128xf32>
    %cst_11 = arith.constant 0.000000e+00 : f32
    %16 = vector.broadcast %cst_11 : f32 to vector<4x1x128xf32>
    %17 = vector.shape_cast %15 : vector<32x128xf32> to vector<4x8x128xf32>
    %18 = tpu.concatenate %16, %17, %16 in 1 : vector<4x1x128xf32>, vector<4x8x128xf32>, vector<4x1x128xf32> -> vector<4x10x128xf32>
    %19 = vector.extract_strided_slice %18 {offsets = [0, 0, 0], sizes = [4, 8, 128], strides = [1, 1, 1]} : vector<4x10x128xf32> to vector<4x8x128xf32>
    %20 = vector.extract_strided_slice %18 {offsets = [0, 1, 0], sizes = [4, 8, 128], strides = [1, 1, 1]} : vector<4x10x128xf32> to vector<4x8x128xf32>
    %21 = vector.extract_strided_slice %18 {offsets = [0, 2, 0], sizes = [4, 8, 128], strides = [1, 1, 1]} : vector<4x10x128xf32> to vector<4x8x128xf32>
    %22 = tpu.concatenate %19, %20, %21 in 2 : vector<4x8x128xf32>, vector<4x8x128xf32>, vector<4x8x128xf32> -> vector<4x8x384xf32>
    %23 = vector.shape_cast %22 : vector<4x8x384xf32> to vector<32x384xf32>
    %24 = arith.truncf %23 : vector<32x384xf32> to vector<32x384xbf16>
    %c0_12 = arith.constant 0 : index
    %c0_13 = arith.constant 0 : index
    %25 = vector.load %arg3[%c0_12, %c0_13] : memref<384x128xbf16, #tpu.memory_space<vmem>>, vector<384x128xbf16>
    %cst_14 = arith.constant dense<0.000000e+00> : vector<32x128xf32>
    %26 = tpu.matmul %24, %25, %cst_14 {dimension_numbers = #tpu.dot_dimension_numbers<[1], [0], [0], [1], [0, 0, 1, 1], [], []>} : vector<32x384xbf16>, vector<384x128xbf16>, vector<32x128xf32> -> vector<32x128xf32>
    %c0_15 = arith.constant 0 : index
    %c0_16 = arith.constant 0 : index
    %27 = vector.load %arg4[%c0_15, %c0_16] : memref<1x128xf32, #tpu.memory_space<vmem>>, vector<1x128xf32>
    %28 = vector.broadcast %27 : vector<1x128xf32> to vector<32x128xf32>
    %29 = arith.addf %26, %28 : vector<32x128xf32>
    %cst_17 = arith.constant 0.000000e+00 : f32
    %30 = vector.broadcast %cst_17 : f32 to vector<32x128xf32>
    %31 = arith.maximumf %29, %30 : vector<32x128xf32>
    %c0_18 = arith.constant 0 : index
    %c0_19 = arith.constant 0 : index
    %32 = vector.load %arg11[%c0_18, %c0_19] : memref<32x128xf32, #tpu.memory_space<vmem>>, vector<32x128xf32>
    tpu.vector_store %arg11[%c0_18, %c0_19], %31 {strides = array<i32>} : memref<32x128xf32, #tpu.memory_space<vmem>>, vector<32x128xf32>,
    %c0_20 = arith.constant 0 : index
    %c0_21 = arith.constant 0 : index
    %33 = tpu.strided_load %arg11[%c0_20, %c0_21] {strides = array<i32: 2, 1>} : memref<32x128xf32, #tpu.memory_space<vmem>>, vector<16x128xf32>
    %c1_22 = arith.constant 1 : index
    %c0_23 = arith.constant 0 : index
    %34 = tpu.strided_load %arg11[%c1_22, %c0_23] {strides = array<i32: 2, 1>} : memref<32x128xf32, #tpu.memory_space<vmem>>, vector<16x128xf32>
    %35 = arith.maximumf %33, %34 : vector<16x128xf32>
    %36 = vector.extract_strided_slice %35 {offsets = [0, 16], sizes = [16, 112], strides = [1, 1]} : vector<16x128xf32> to vector<16x112xf32>
    %37 = vector.extract_strided_slice %35 {offsets = [0, 0], sizes = [16, 16], strides = [1, 1]} : vector<16x128xf32> to vector<16x16xf32>
    %38 = tpu.concatenate %36, %37 in 1 : vector<16x112xf32>, vector<16x16xf32> -> vector<16x128xf32>
    %39 = arith.maximumf %35, %38 : vector<16x128xf32>
    %c0_24 = arith.constant 0 : index
    %c0_25 = arith.constant 0 : index
    %40 = vector.load %arg12[%c0_24, %c0_25] : memref<16x128xf32, #tpu.memory_space<vmem>>, vector<16x128xf32>
    tpu.vector_store %arg12[%c0_24, %c0_25], %39 {strides = array<i32>} : memref<16x128xf32, #tpu.memory_space<vmem>>, vector<16x128xf32>,
    %c0_26 = arith.constant 0 : index
    %c0_27 = arith.constant 0 : index
    %41 = tpu.strided_load %arg12[%c0_26, %c0_27] {strides = array<i32: 4, 1>} : memref<16x128xf32, #tpu.memory_space<vmem>>, vector<4x128xf32>
    %c1_28 = arith.constant 1 : index
    %c0_29 = arith.constant 0 : index
    %42 = tpu.strided_load %arg12[%c1_28, %c0_29] {strides = array<i32: 4, 1>} : memref<16x128xf32, #tpu.memory_space<vmem>>, vector<4x128xf32>
    %c2 = arith.constant 2 : index
    %c0_30 = arith.constant 0 : index
    %43 = tpu.strided_load %arg12[%c2, %c0_30] {strides = array<i32: 4, 1>} : memref<16x128xf32, #tpu.memory_space<vmem>>, vector<4x128xf32>
    %c3 = arith.constant 3 : index
    %c0_31 = arith.constant 0 : index
    %44 = tpu.strided_load %arg12[%c3, %c0_31] {strides = array<i32: 4, 1>} : memref<16x128xf32, #tpu.memory_space<vmem>>, vector<4x128xf32>
    %45 = tpu.concatenate %41, %42, %43, %44 in 1 : vector<4x128xf32>, vector<4x128xf32>, vector<4x128xf32>, vector<4x128xf32> -> vector<4x512xf32>
    %46 = arith.truncf %45 : vector<4x512xf32> to vector<4x512xbf16>
    %c0_32 = arith.constant 0 : index
    %c0_33 = arith.constant 0 : index
    %47 = vector.load %arg5[%c0_32, %c0_33] : memref<512x64xbf16, #tpu.memory_space<vmem>>, vector<512x64xbf16>
    %cst_34 = arith.constant dense<0.000000e+00> : vector<4x64xf32>
    %48 = tpu.matmul %46, %47, %cst_34 {dimension_numbers = #tpu.dot_dimension_numbers<[1], [0], [0], [1], [0, 0, 1, 1], [], []>} : vector<4x512xbf16>, vector<512x64xbf16>, vector<4x64xf32> -> vector<4x64xf32>
    %c0_35 = arith.constant 0 : index
    %c0_36 = arith.constant 0 : index
    %49 = vector.load %arg6[%c0_35, %c0_36] : memref<1x64xf32, #tpu.memory_space<vmem>>, vector<1x64xf32>
    %50 = vector.broadcast %49 : vector<1x64xf32> to vector<4x64xf32>
    %51 = arith.addf %48, %50 : vector<4x64xf32>
    %cst_37 = arith.constant 0.000000e+00 : f32
    %52 = vector.broadcast %cst_37 : f32 to vector<4x64xf32>
    %53 = arith.maximumf %51, %52 : vector<4x64xf32>
    %54 = arith.truncf %53 : vector<4x64xf32> to vector<4x64xbf16>
    %c0_38 = arith.constant 0 : index
    %c0_39 = arith.constant 0 : index
    %55 = vector.load %arg7[%c0_38, %c0_39] : memref<64x32xbf16, #tpu.memory_space<vmem>>, vector<64x32xbf16>
    %cst_40 = arith.constant dense<0.000000e+00> : vector<4x32xf32>
    %56 = tpu.matmul %54, %55, %cst_40 {dimension_numbers = #tpu.dot_dimension_numbers<[1], [0], [0], [1], [0, 0, 1, 1], [], []>} : vector<4x64xbf16>, vector<64x32xbf16>, vector<4x32xf32> -> vector<4x32xf32>
    %c0_41 = arith.constant 0 : index
    %c0_42 = arith.constant 0 : index
    %57 = vector.load %arg8[%c0_41, %c0_42] : memref<1x32xf32, #tpu.memory_space<vmem>>, vector<1x32xf32>
    %58 = vector.broadcast %57 : vector<1x32xf32> to vector<4x32xf32>
    %59 = arith.addf %56, %58 : vector<4x32xf32>
    %c0_43 = arith.constant 0 : index
    %c0_44 = arith.constant 0 : index
    %60 = vector.load %arg9[%c0_43, %c0_44] : memref<4x32xf32, #tpu.memory_space<vmem>>, vector<4x32xf32>
    tpu.vector_store %arg9[%c0_43, %c0_44], %59 {strides = array<i32>} : memref<4x32xf32, #tpu.memory_space<vmem>>, vector<4x32xf32>,
    return
  }
}

</mosaic_0001>

<llo_original>
// kernel: face_siamese_net.1
$region0: #{face_siamese_net.1}
  #allocation0 [shape = 'u32[]', space=smem, size = 0x4, offset = 0x4, fixed_abs, tag = 'smem constant byte address 0x4 - core index']
  #allocation1 [shape = 'u32[144,128]{1,0:T(1,128)}', space=vmem, size = 0x12000, scoped, tag = 'internal scratch']
  #allocation2 [shape = 'f32[64,128]{1,0:T(8,128)}', space=vmem, size = 0x8000, scoped, tag = 'scratch operand']
  #allocation3 [shape = 'f32[32,128]{1,0:T(8,128)}', space=vmem, size = 0x4000, scoped, tag = 'scratch operand']
  #allocation4 [shape = 'f32[16,128]{1,0:T(8,128)}', space=vmem, size = 0x2000, scoped, tag = 'scratch operand']
  %s0 = inlined_call_operand.vmem [shape: bf16[64,384], index: 0, kind: input, shape index: {}]
  %s1 = inlined_call_operand.vmem [shape: bf16[384,128], index: 1, kind: input, shape index: {}]
  %s2 = inlined_call_operand.vmem [shape: f32[1,128], index: 2, kind: input, shape index: {}]
  %s3 = inlined_call_operand.vmem [shape: bf16[384,128], index: 3, kind: input, shape index: {}]
  %s4 = inlined_call_operand.vmem [shape: f32[1,128], index: 4, kind: input, shape index: {}]
  %s5 = inlined_call_operand.vmem [shape: bf16[512,64], index: 5, kind: input, shape index: {}]
  %s6 = inlined_call_operand.vmem [shape: f32[1,64], index: 6, kind: input, shape index: {}]
  %s7 = inlined_call_operand.vmem [shape: bf16[64,32], index: 7, kind: input, shape index: {}]
  %s8 = inlined_call_operand.vmem [shape: f32[1,32], index: 8, kind: input, shape index: {}]
  %s9 = inlined_call_operand.vmem [shape: f32[4,32], index: 9, kind: output, shape index: {}]
  %s10 = sld [smem:[#allocation0]]
  $region46: #{face_siamese_net.1} parent=0
    _
  %s12 = ssub.s32 1, %s10
  %s13 = scalar_select 0, %s12, %s10
  // Predicated region
  $region2: #{face_siamese_net.1} parent=0 // pred_check
    _
  $region3: #{face_siamese_net.1} parent=0 // pred_check_branch
    %15 = sbr.rel (0) target = $region5
  $region4: #{face_siamese_net.1} parent=0 // pred_region
    _
  $region5: #{face_siamese_net.1} parent=0 // pred_fallthru
    _
  // Predicated region
  $region6: #{face_siamese_net.1} parent=0 // pred_check
    _
  $region7: #{face_siamese_net.1} parent=0 // pred_check_branch
    %17 = sbr.rel (0) target = $region9
  $region8: #{face_siamese_net.1} parent=0 // pred_region
    _
  $region9: #{face_siamese_net.1} parent=0 // pred_fallthru
    _
  // Predicated region
  $region10: #{face_siamese_net.1} parent=0 // pred_check
    _
  $region11: #{face_siamese_net.1} parent=0 // pred_check_branch
    %19 = sbr.rel (0) target = $region13
  $region12: #{face_siamese_net.1} parent=0 // pred_region
    _
  $region13: #{face_siamese_net.1} parent=0 // pred_fallthru
    _
  // Predicated region
  $region14: #{face_siamese_net.1} parent=0 // pred_check
    _
  $region15: #{face_siamese_net.1} parent=0 // pred_check_branch
    %21 = sbr.rel (0) target = $region17
  $region16: #{face_siamese_net.1} parent=0 // pred_region
    _
  $region17: #{face_siamese_net.1} parent=0 // pred_fallthru
    _
  // Predicated region
  $region18: #{face_siamese_net.1} parent=0 // pred_check
    _
  $region19: #{face_siamese_net.1} parent=0 // pred_check_branch
    %23 = sbr.rel (0) target = $region21
  $region20: #{face_siamese_net.1} parent=0 // pred_region
    _
  $region21: #{face_siamese_net.1} parent=0 // pred_fallthru
    _
  // Predicated region
  $region22: #{face_siamese_net.1} parent=0 // pred_check
    _
  $region23: #{face_siamese_net.1} parent=0 // pred_check_branch
    %25 = sbr.rel (0) target = $region25
  $region24: #{face_siamese_net.1} parent=0 // pred_region
    _
  $region25: #{face_siamese_net.1} parent=0 // pred_fallthru
    _
  // Predicated region
  $region26: #{face_siamese_net.1} parent=0 // pred_check
    _
  $region27: #{face_siamese_net.1} parent=0 // pred_check_branch
    %27 = sbr.rel (0) target = $region29
  $region28: #{face_siamese_net.1} parent=0 // pred_region
    _
  $region29: #{face_siamese_net.1} parent=0 // pred_fallthru
    _
  // Predicated region
  $region30: #{face_siamese_net.1} parent=0 // pred_check
    _
  $region31: #{face_siamese_net.1} parent=0 // pred_check_branch
    %29 = sbr.rel (0) target = $region33
  $region32: #{face_siamese_net.1} parent=0 // pred_region
    _
  $region33: #{face_siamese_net.1} parent=0 // pred_fallthru
    _
  // Predicated region
  $region34: #{face_siamese_net.1} parent=0 // pred_check
    _
  $region35: #{face_siamese_net.1} parent=0 // pred_check_branch
    %31 = sbr.rel (0) target = $region37
  $region36: #{face_siamese_net.1} parent=0 // pred_region
    _
  $region37: #{face_siamese_net.1} parent=0 // pred_fallthru
    _
  %v33 = vld [vmem:[%s0] sm:$0xff]
  %v34 = vld [vmem:[%s0 + $0x8] sm:$0xf]
  %v35 = vld [vmem:[%s0 + $0xc] sm:$0xff]
  %v36 = vld [vmem:[%s0 + $0x14] sm:$0xf]
  %v37 = vld [vmem:[%s0 + $0x18] sm:$0xff]
  %v38 = vld [vmem:[%s0 + $0x20] sm:$0xf]
  %v39 = vld [vmem:[%s0 + $0x24] sm:$0xff]
  %v40 = vld [vmem:[%s0 + $0x2c] sm:$0xf]
  %v41 = vld [vmem:[%s0 + $0x30] sm:$0xff]
  %v42 = vld [vmem:[%s0 + $0x38] sm:$0xf]
  %v43 = vld [vmem:[%s0 + $0x3c] sm:$0xff]
  %v44 = vld [vmem:[%s0 + $0x44] sm:$0xf]
  %v45 = vld [vmem:[%s0 + $0x48] sm:$0xff]
  %v46 = vld [vmem:[%s0 + $0x50] sm:$0xf]
  %v47 = vld [vmem:[%s0 + $0x54] sm:$0xff]
  %v48 = vld [vmem:[%s0 + $0x5c] sm:$0xf]
  %v49 = vld [vmem:[%s1] sm:$0xf]
  %v50 = vld [vmem:[%s1 + $0x4] sm:$0xf]
  %v51 = vld [vmem:[%s1 + $0x8] sm:$0xf]
  %v52 = vld [vmem:[%s1 + $0xc] sm:$0xf]
  %v53 = vld [vmem:[%s1 + $0x10] sm:$0xf]
  %v54 = vld [vmem:[%s1 + $0x14] sm:$0xf]
  %v55 = vld [vmem:[%s1 + $0x18] sm:$0xf]
  %v56 = vld [vmem:[%s1 + $0x1c] sm:$0xf]
  %v57 = vld [vmem:[%s1 + $0x20] sm:$0xf]
  %v58 = vld [vmem:[%s1 + $0x24] sm:$0xf]
  %v59 = vld [vmem:[%s1 + $0x28] sm:$0xf]
  %v60 = vld [vmem:[%s1 + $0x2c] sm:$0xf]
  %v61 = vld [vmem:[%s1 + $0x30] sm:$0xf]
  %v62 = vld [vmem:[%s1 + $0x34] sm:$0xf]
  %v63 = vld [vmem:[%s1 + $0x38] sm:$0xf]
  %v64 = vld [vmem:[%s1 + $0x3c] sm:$0xf]
  %v65 = vld [vmem:[%s1 + $0x40] sm:$0xf]
  %v66 = vld [vmem:[%s1 + $0x44] sm:$0xf]
  %v67 = vld [vmem:[%s1 + $0x48] sm:$0xf]
  %v68 = vld [vmem:[%s1 + $0x4c] sm:$0xf]
  %v69 = vld [vmem:[%s1 + $0x50] sm:$0xf]
  %v70 = vld [vmem:[%s1 + $0x54] sm:$0xf]
  %v71 = vld [vmem:[%s1 + $0x58] sm:$0xf]
  %v72 = vld [vmem:[%s1 + $0x5c] sm:$0xf]
  %v73 = vld [vmem:[%s1 + $0x60] sm:$0xf]
  %v74 = vld [vmem:[%s1 + $0x64] sm:$0xf]
  %v75 = vld [vmem:[%s1 + $0x68] sm:$0xf]
  %v76 = vld [vmem:[%s1 + $0x6c] sm:$0xf]
  %v77 = vld [vmem:[%s1 + $0x70] sm:$0xf]
  %v78 = vld [vmem:[%s1 + $0x74] sm:$0xf]
  %v79 = vld [vmem:[%s1 + $0x78] sm:$0xf]
  %v80 = vld [vmem:[%s1 + $0x7c] sm:$0xf]
  %v81 = vld [vmem:[%s1 + $0x80] sm:$0xf]
  %v82 = vld [vmem:[%s1 + $0x84] sm:$0xf]
  %v83 = vld [vmem:[%s1 + $0x88] sm:$0xf]
  %v84 = vld [vmem:[%s1 + $0x8c] sm:$0xf]
  %v85 = vld [vmem:[%s1 + $0x90] sm:$0xf]
  %v86 = vld [vmem:[%s1 + $0x94] sm:$0xf]
  %v87 = vld [vmem:[%s1 + $0x98] sm:$0xf]
  %v88 = vld [vmem:[%s1 + $0x9c] sm:$0xf]
  %v89 = vld [vmem:[%s1 + $0xa0] sm:$0xf]
  %v90 = vld [vmem:[%s1 + $0xa4] sm:$0xf]
  %v91 = vld [vmem:[%s1 + $0xa8] sm:$0xf]
  %v92 = vld [vmem:[%s1 + $0xac] sm:$0xf]
  %v93 = vld [vmem:[%s1 + $0xb0] sm:$0xf]
  %v94 = vld [vmem:[%s1 + $0xb4] sm:$0xf]
  %v95 = vld [vmem:[%s1 + $0xb8] sm:$0xf]
  %v96 = vld [vmem:[%s1 + $0xbc] sm:$0xf]
  %v97 = vld [vmem:[%s2] sm:$0x1]
  %v99 = vlaneseq
  %v100 = vshrl.u32 %v99, 7
  %v101 = vsub.s32 0, %v100
  %v102 = vrot.slane %v97, %v101
  %v120 = vunpack.c.l.b16 %v33
  %v121 = vunpack.c.h.b16 %v33
  %v122 = vunpack.c.l.b16 %v34
  %v123 = vunpack.c.l.b16 %v35
  %v124 = vunpack.c.h.b16 %v35
  %v125 = vunpack.c.l.b16 %v36
  %v126 = vunpack.c.l.b16 %v37
  %v127 = vunpack.c.h.b16 %v37
  %v128 = vunpack.c.l.b16 %v38
  %v129 = vunpack.c.l.b16 %v39
  %v130 = vunpack.c.h.b16 %v39
  %v131 = vunpack.c.l.b16 %v40
  %v132 = vunpack.c.l.b16 %v41
  %v133 = vunpack.c.h.b16 %v41
  %v134 = vunpack.c.l.b16 %v42
  %v135 = vunpack.c.l.b16 %v43
  %v136 = vunpack.c.h.b16 %v43
  %v137 = vunpack.c.l.b16 %v44
  %v138 = vunpack.c.l.b16 %v45
  %v139 = vunpack.c.h.b16 %v45
  %v140 = vunpack.c.l.b16 %v46
  %v141 = vunpack.c.l.b16 %v47
  %v142 = vunpack.c.h.b16 %v47
  %v143 = vunpack.c.l.b16 %v48
  %v144 = vpack.c.b16 %v123, %v120
  %v145 = vpack.c.b16 %v124, %v121
  %v146 = vpack.c.b16 %v125, %v122
  %v147 = vpack.c.b16 %v129, %v126
  %v148 = vpack.c.b16 %v130, %v127
  %v149 = vpack.c.b16 %v131, %v128
  %v150 = vpack.c.b16 %v135, %v132
  %v151 = vpack.c.b16 %v136, %v133
  %v152 = vpack.c.b16 %v137, %v134
  %v153 = vpack.c.b16 %v141, %v138
  %v154 = vpack.c.b16 %v142, %v139
  %v155 = vpack.c.b16 %v143, %v140
  %v216 = vunpack.c.l.b16 %v49
  %v217 = vunpack.c.l.b16 %v50
  %v218 = vunpack.c.l.b16 %v51
  %v219 = vunpack.c.l.b16 %v52
  %v220 = vunpack.c.l.b16 %v53
  %v221 = vunpack.c.l.b16 %v54
  %v222 = vunpack.c.l.b16 %v55
  %v223 = vunpack.c.l.b16 %v56
  %v224 = vunpack.c.l.b16 %v57
  %v225 = vunpack.c.l.b16 %v58
  %v226 = vunpack.c.l.b16 %v59
  %v227 = vunpack.c.l.b16 %v60
  %v228 = vunpack.c.l.b16 %v61
  %v229 = vunpack.c.l.b16 %v62
  %v230 = vunpack.c.l.b16 %v63
  %v231 = vunpack.c.l.b16 %v64
  %v232 = vunpack.c.l.b16 %v65
  %v233 = vunpack.c.l.b16 %v66
  %v234 = vunpack.c.l.b16 %v67
  %v235 = vunpack.c.l.b16 %v68
  %v236 = vunpack.c.l.b16 %v69
  %v237 = vunpack.c.l.b16 %v70
  %v238 = vunpack.c.l.b16 %v71
  %v239 = vunpack.c.l.b16 %v72
  %v240 = vunpack.c.l.b16 %v73
  %v241 = vunpack.c.l.b16 %v74
  %v242 = vunpack.c.l.b16 %v75
  %v243 = vunpack.c.l.b16 %v76
  %v244 = vunpack.c.l.b16 %v77
  %v245 = vunpack.c.l.b16 %v78
  %v246 = vunpack.c.l.b16 %v79
  %v247 = vunpack.c.l.b16 %v80
  %v248 = vunpack.c.l.b16 %v81
  %v249 = vunpack.c.l.b16 %v82
  %v250 = vunpack.c.l.b16 %v83
  %v251 = vunpack.c.l.b16 %v84
  %v252 = vunpack.c.l.b16 %v85
  %v253 = vunpack.c.l.b16 %v86
  %v254 = vunpack.c.l.b16 %v87
  %v255 = vunpack.c.l.b16 %v88
  %v256 = vunpack.c.l.b16 %v89
  %v257 = vunpack.c.l.b16 %v90
  %v258 = vunpack.c.l.b16 %v91
  %v259 = vunpack.c.l.b16 %v92
  %v260 = vunpack.c.l.b16 %v93
  %v261 = vunpack.c.l.b16 %v94
  %v262 = vunpack.c.l.b16 %v95
  %v263 = vunpack.c.l.b16 %v96
  %v264 = vpack.c.b16 %v217, %v216
  %v265 = vpack.c.b16 %v219, %v218
  %v266 = vpack.c.b16 %v221, %v220
  %v267 = vpack.c.b16 %v223, %v222
  %v268 = vpack.c.b16 %v225, %v224
  %v269 = vpack.c.b16 %v227, %v226
  %v270 = vpack.c.b16 %v229, %v228
  %v271 = vpack.c.b16 %v231, %v230
  %v272 = vpack.c.b16 %v233, %v232
  %v273 = vpack.c.b16 %v235, %v234
  %v274 = vpack.c.b16 %v237, %v236
  %v275 = vpack.c.b16 %v239, %v238
  %v276 = vpack.c.b16 %v241, %v240
  %v277 = vpack.c.b16 %v243, %v242
  %v278 = vpack.c.b16 %v245, %v244
  %v279 = vpack.c.b16 %v247, %v246
  %v280 = vpack.c.b16 %v249, %v248
  %v281 = vpack.c.b16 %v251, %v250
  %v282 = vpack.c.b16 %v253, %v252
  %v283 = vpack.c.b16 %v255, %v254
  %v284 = vpack.c.b16 %v257, %v256
  %v285 = vpack.c.b16 %v259, %v258
  %v286 = vpack.c.b16 %v261, %v260
  %v287 = vpack.c.b16 %v263, %v262
  %312 = vmatprep.subr.bf16.mxu0 0
  %313 = vmatpush1.bf16.msra.mxu0 %v264
  %314 = vmatprep.subr.bf16.mxu0 0
  %315 = vmatpush1.bf16.msra.mxu0 %v265
  %316 = vmatprep.subr.bf16.mxu0 0
  %317 = vmatpush1.bf16.msra.mxu0 %v266
  %318 = vmatprep.subr.bf16.mxu0 0
  %319 = vmatpush1.bf16.msra.mxu0 %v267
  %320 = vmatprep.subr.bf16.mxu0 0
  %321 = vmatpush1.bf16.msra.mxu0 %v268
  %322 = vmatprep.subr.bf16.mxu0 0
  %323 = vmatpush1.bf16.msra.mxu0 %v269
  %324 = vmatprep.subr.bf16.mxu0 0
  %325 = vmatpush1.bf16.msra.mxu0 %v270
  %326 = vmatprep.subr.bf16.mxu0 0
  %327 = vmatpush1.bf16.msra.mxu0 %v271
  %328 = vmatprep.subr.bf16.mxu0 0
  %329 = vmatpush1.bf16.msra.mxu0 %v272
  %330 = vmatprep.subr.bf16.mxu0 0
  %331 = vmatpush1.bf16.msra.mxu0 %v273
  %332 = vmatprep.subr.bf16.mxu0 0
  %333 = vmatpush1.bf16.msra.mxu0 %v274
  %334 = vmatprep.subr.bf16.mxu0 0
  %335 = vmatpush1.bf16.msra.mxu0 %v275
  %336 = vmatprep.subr.bf16.mxu0 0
  %337 = vmatpush1.bf16.msra.mxu0 %v276
  %338 = vmatprep.subr.bf16.mxu0 0
  %339 = vmatpush1.bf16.msra.mxu0 %v277
  %340 = vmatprep.subr.bf16.mxu0 0
  %341 = vmatpush1.bf16.msra.mxu0 %v278
  %342 = vmatprep.subr.bf16.mxu0 0
  %343 = vmatpush1.bf16.msra.mxu0 %v279
  %344 = vmatprep.mubr.bf16.mxu0 %v145
  %345 = vmatmul.mubr.bf16.gmra.mrb[0].mxu0 %v144
  %v346 = vpop.f32.mrb[0].mxu0
  %v347 = vadd.f32 %v102, %v346
  %v348 = vpop.f32.mrb[0].mxu0
  %v349 = vpop.f32.mrb[0].mxu0
  %v350 = vadd.f32 %v102, %v349
  %v351 = vpop.f32.mrb[0].mxu0
  %352 = vmatprep.mubr.bf16.mxu0 %v148
  %353 = vmatmul.mubr.bf16.gmra.mrb[0].mxu0 %v147
  %v354 = vpop.f32.mrb[0].mxu0
  %v355 = vadd.f32 %v102, %v354
  %v356 = vpop.f32.mrb[0].mxu0
  %v357 = vpop.f32.mrb[0].mxu0
  %v358 = vadd.f32 %v102, %v357
  %v359 = vpop.f32.mrb[0].mxu0
  %360 = vmatprep.mubr.bf16.mxu0 %v151
  %361 = vmatmul.mubr.bf16.gmra.mrb[0].mxu0 %v150
  %v362 = vpop.f32.mrb[0].mxu0
  %v363 = vadd.f32 %v102, %v362
  %v364 = vpop.f32.mrb[0].mxu0
  %v365 = vpop.f32.mrb[0].mxu0
  %v366 = vadd.f32 %v102, %v365
  %v367 = vpop.f32.mrb[0].mxu0
  %368 = vmatprep.mubr.bf16.mxu0 %v154
  %369 = vmatmul.mubr.bf16.gmra.mrb[0].mxu0 %v153
  %v370 = vpop.f32.mrb[0].mxu0
  %v371 = vadd.f32 %v102, %v370
  %v372 = vpop.f32.mrb[0].mxu0
  %v373 = vpop.f32.mrb[0].mxu0
  %v374 = vadd.f32 %v102, %v373
  %v375 = vpop.f32.mrb[0].mxu0
  %376 = vdwg.mxu0
  %377 = vmatprep.subr.bf16.mxu0 0
  %378 = vmatpush1.bf16.msra.mxu0 %v280
  %379 = vmatprep.subr.bf16.mxu0 0
  %380 = vmatpush1.bf16.msra.mxu0 %v281
  %381 = vmatprep.subr.bf16.mxu0 0
  %382 = vmatpush1.bf16.msra.mxu0 %v282
  %383 = vmatprep.subr.bf16.mxu0 0
  %384 = vmatpush1.bf16.msra.mxu0 %v283
  %385 = vmatprep.subr.bf16.mxu0 0
  %386 = vmatpush1.bf16.msra.mxu0 %v284
  %387 = vmatprep.subr.bf16.mxu0 0
  %388 = vmatpush1.bf16.msra.mxu0 %v285
  %389 = vmatprep.subr.bf16.mxu0 0
  %390 = vmatpush1.bf16.msra.mxu0 %v286
  %391 = vmatprep.subr.bf16.mxu0 0
  %392 = vmatpush1.bf16.msra.mxu0 %v287
  %393 = vmatprep.subr.bf16.mxu0 0
  %394 = vmatpush1.bf16.msra.mxu0 0
  %395 = vmatprep.subr.bf16.mxu0 0
  %396 = vmatpush1.bf16.msra.mxu0 0
  %397 = vmatprep.subr.bf16.mxu0 0
  %398 = vmatpush1.bf16.msra.mxu0 0
  %399 = vmatprep.subr.bf16.mxu0 0
  %400 = vmatpush1.bf16.msra.mxu0 0
  %401 = vmatprep.subr.bf16.mxu0 0
  %402 = vmatpush1.bf16.msra.mxu0 0
  %403 = vmatprep.subr.bf16.mxu0 0
  %404 = vmatpush1.bf16.msra.mxu0 0
  %405 = vmatprep.subr.bf16.mxu0 0
  %406 = vmatpush1.bf16.msra.mxu0 0
  %407 = vmatprep.subr.bf16.mxu0 0
  %408 = vmatpush1.bf16.msra.mxu0 0
  %409 = vmatprep.mubr.bf16.mxu0 0
  %410 = vmatmul.mubr.bf16.gmra.mrb[0].mxu0 %v146
  %v411 = vpop.f32.mrb[0].mxu0
  %v412 = vadd.f32 %v347, %v411
  %v413 = vpop.f32.mrb[0].mxu0
  %v414 = vpop.f32.mrb[0].mxu0
  %v415 = vadd.f32 %v350, %v414
  %v416 = vpop.f32.mrb[0].mxu0
  %417 = vmatprep.mubr.bf16.mxu0 0
  %418 = vmatmul.mubr.bf16.gmra.mrb[0].mxu0 %v149
  %v419 = vpop.f32.mrb[0].mxu0
  %v420 = vadd.f32 %v355, %v419
  %v421 = vpop.f32.mrb[0].mxu0
  %v422 = vpop.f32.mrb[0].mxu0
  %v423 = vadd.f32 %v358, %v422
  %v424 = vpop.f32.mrb[0].mxu0
  %425 = vmatprep.mubr.bf16.mxu0 0
  %426 = vmatmul.mubr.bf16.gmra.mrb[0].mxu0 %v152
  %v427 = vpop.f32.mrb[0].mxu0
  %v428 = vadd.f32 %v363, %v427
  %v429 = vpop.f32.mrb[0].mxu0
  %v430 = vpop.f32.mrb[0].mxu0
  %v431 = vadd.f32 %v366, %v430
  %v432 = vpop.f32.mrb[0].mxu0
  %433 = vmatprep.mubr.bf16.mxu0 0
  %434 = vmatmul.mubr.bf16.gmra.mrb[0].mxu0 %v155
  %v435 = vpop.f32.mrb[0].mxu0
  %v436 = vadd.f32 %v371, %v435
  %v437 = vpop.f32.mrb[0].mxu0
  %v438 = vpop.f32.mrb[0].mxu0
  %v439 = vadd.f32 %v374, %v438
  %v440 = vpop.f32.mrb[0].mxu0
  %441 = vdwg.mxu0
  %v442 = vmax.f32 %v412, 0.0
  %v443 = vmax.f32 %v415, 0.0
  %v444 = vmax.f32 %v420, 0.0
  %v445 = vmax.f32 %v423, 0.0
  %v446 = vmax.f32 %v428, 0.0
  %v447 = vmax.f32 %v431, 0.0
  %v448 = vmax.f32 %v436, 0.0
  %v449 = vmax.f32 %v439, 0.0
  %450 = vst [vmem:[#allocation2] sm:$0xff] %v442
  %451 = vst [vmem:[#allocation2 + $0x8] sm:$0xff] %v443
  %452 = vst [vmem:[#allocation2 + $0x10] sm:$0xff] %v444
  %453 = vst [vmem:[#allocation2 + $0x18] sm:$0xff] %v445
  %454 = vst [vmem:[#allocation2 + $0x20] sm:$0xff] %v446
  %455 = vst [vmem:[#allocation2 + $0x28] sm:$0xff] %v447
  %456 = vst [vmem:[#allocation2 + $0x30] sm:$0xff] %v448
  %457 = vst [vmem:[#allocation2 + $0x38] sm:$0xff] %v449
  %v458 = vld [vmem:[#allocation2] ss:$2 sm:$0xff]
  %s459 = scalar_lea.vmem [#allocation2], 16
  %v460 = vld [vmem:[%s459] ss:$2 sm:$0xff]
  %s461 = scalar_lea.vmem [#allocation2], 32
  %v462 = vld [vmem:[%s461] ss:$2 sm:$0xff]
  %s463 = scalar_lea.vmem [#allocation2], 48
  %v464 = vld [vmem:[%s463] ss:$2 sm:$0xff]
  %s465 = scalar_lea.vmem [#allocation2], 1
  %v466 = vld [vmem:[%s465] ss:$2 sm:$0xff]
  %s467 = scalar_lea.vmem [#allocation2], 17
  %v468 = vld [vmem:[%s467] ss:$2 sm:$0xff]
  %s469 = scalar_lea.vmem [#allocation2], 33
  %v470 = vld [vmem:[%s469] ss:$2 sm:$0xff]
  %s471 = scalar_lea.vmem [#allocation2], 49
  %v472 = vld [vmem:[%s471] ss:$2 sm:$0xff]
  %v473 = vmax.f32 %v458, %v466
  %v474 = vmax.f32 %v460, %v468
  %v475 = vmax.f32 %v462, %v470
  %v476 = vmax.f32 %v464, %v472
  %481 = vrot.lane.b32.xlu0 %v473, 120
  %v482 = vpop.permute.xlu0 %481
  %483 = vrot.lane.b32.xlu0 %v474, 120
  %v484 = vpop.permute.xlu0 %483
  %485 = vrot.lane.b32.xlu0 %v475, 120
  %v486 = vpop.permute.xlu0 %485
  %487 = vrot.lane.b32.xlu0 %v476, 120
  %v488 = vpop.permute.xlu0 %487
  %v493 = vmax.f32 %v473, %v482
  %v494 = vmax.f32 %v474, %v484
  %v495 = vmax.f32 %v475, %v486
  %v496 = vmax.f32 %v476, %v488
  %v501 = vrot.slane %v493, 7
  %v502 = vrot.slane %v494, 7
  %v503 = vrot.slane %v495, 7
  %v504 = vrot.slane %v496, 7
  %vm509 = vcmask 1040384
  %v510 = vsel %vm509, 0.0, %v501
  %v511 = vsel %vm509, 0.0, %v502
  %v512 = vsel %vm509, 0.0, %v503
  %v513 = vsel %vm509, 0.0, %v504
  %v514 = vsel %vm509, %v501, 0.0
  %v515 = vsel %vm509, %v502, 0.0
  %v516 = vsel %vm509, %v503, 0.0
  %v517 = vsel %vm509, %v504, 0.0
  %vm526 = vcmask 1046528
  %v527 = vrot.slane %v510, 1
  %v528 = vrot.slane %v514, 1
  %v529 = vsel %vm526, %v527, %v528
  %v530 = vrot.slane %v511, 1
  %v531 = vrot.slane %v515, 1
  %v532 = vsel %vm526, %v530, %v531
  %v533 = vrot.slane %v512, 1
  %v534 = vrot.slane %v516, 1
  %v535 = vsel %vm526, %v533, %v534
  %v536 = vrot.slane %v513, 1
  %v537 = vrot.slane %v517, 1
  %v538 = vsel %vm526, %v536, %v537
  %vm543 = vcmask 1045504
  %v544 = vrot.slane %v510, 2
  %v545 = vrot.slane %v514, 2
  %v546 = vsel %vm543, %v544, %v545
  %v547 = vrot.slane %v511, 2
  %v548 = vrot.slane %v515, 2
  %v549 = vsel %vm543, %v547, %v548
  %v550 = vrot.slane %v512, 2
  %v551 = vrot.slane %v516, 2
  %v552 = vsel %vm543, %v550, %v551
  %v553 = vrot.slane %v513, 2
  %v554 = vrot.slane %v517, 2
  %v555 = vsel %vm543, %v553, %v554
  %v560 = vpack.c.bf16 %v511, %v510
  %v561 = vpack.c.bf16 %v532, %v529
  %v562 = vpack.c.bf16 %v549, %v546
  %v563 = vpack.c.bf16 %v513, %v512
  %v564 = vpack.c.bf16 %v538, %v535
  %v565 = vpack.c.bf16 %v555, %v552
  %v566 = vld [vmem:[%s3] sm:$0xf]
  %v567 = vld [vmem:[%s3 + $0x4] sm:$0xf]
  %v568 = vld [vmem:[%s3 + $0x8] sm:$0xf]
  %v569 = vld [vmem:[%s3 + $0xc] sm:$0xf]
  %v570 = vld [vmem:[%s3 + $0x10] sm:$0xf]
  %v571 = vld [vmem:[%s3 + $0x14] sm:$0xf]
  %v572 = vld [vmem:[%s3 + $0x18] sm:$0xf]
  %v573 = vld [vmem:[%s3 + $0x1c] sm:$0xf]
  %v574 = vld [vmem:[%s3 + $0x20] sm:$0xf]
  %v575 = vld [vmem:[%s3 + $0x24] sm:$0xf]
  %v576 = vld [vmem:[%s3 + $0x28] sm:$0xf]
  %v577 = vld [vmem:[%s3 + $0x2c] sm:$0xf]
  %v578 = vld [vmem:[%s3 + $0x30] sm:$0xf]
  %v579 = vld [vmem:[%s3 + $0x34] sm:$0xf]
  %v580 = vld [vmem:[%s3 + $0x38] sm:$0xf]
  %v581 = vld [vmem:[%s3 + $0x3c] sm:$0xf]
  %v582 = vld [vmem:[%s3 + $0x40] sm:$0xf]
  %v583 = vld [vmem:[%s3 + $0x44] sm:$0xf]
  %v584 = vld [vmem:[%s3 + $0x48] sm:$0xf]
  %v585 = vld [vmem:[%s3 + $0x4c] sm:$0xf]
  %v586 = vld [vmem:[%s3 + $0x50] sm:$0xf]
  %v587 = vld [vmem:[%s3 + $0x54] sm:$0xf]
  %v588 = vld [vmem:[%s3 + $0x58] sm:$0xf]
  %v589 = vld [vmem:[%s3 + $0x5c] sm:$0xf]
  %v590 = vld [vmem:[%s3 + $0x60] sm:$0xf]
  %v591 = vld [vmem:[%s3 + $0x64] sm:$0xf]
  %v592 = vld [vmem:[%s3 + $0x68] sm:$0xf]
  %v593 = vld [vmem:[%s3 + $0x6c] sm:$0xf]
  %v594 = vld [vmem:[%s3 + $0x70] sm:$0xf]
  %v595 = vld [vmem:[%s3 + $0x74] sm:$0xf]
  %v596 = vld [vmem:[%s3 + $0x78] sm:$0xf]
  %v597 = vld [vmem:[%s3 + $0x7c] sm:$0xf]
  %v598 = vld [vmem:[%s3 + $0x80] sm:$0xf]
  %v599 = vld [vmem:[%s3 + $0x84] sm:$0xf]
  %v600 = vld [vmem:[%s3 + $0x88] sm:$0xf]
  %v601 = vld [vmem:[%s3 + $0x8c] sm:$0xf]
  %v602 = vld [vmem:[%s3 + $0x90] sm:$0xf]
  %v603 = vld [vmem:[%s3 + $0x94] sm:$0xf]
  %v604 = vld [vmem:[%s3 + $0x98] sm:$0xf]
  %v605 = vld [vmem:[%s3 + $0x9c] sm:$0xf]
  %v606 = vld [vmem:[%s3 + $0xa0] sm:$0xf]
  %v607 = vld [vmem:[%s3 + $0xa4] sm:$0xf]
  %v608 = vld [vmem:[%s3 + $0xa8] sm:$0xf]
  %v609 = vld [vmem:[%s3 + $0xac] sm:$0xf]
  %v610 = vld [vmem:[%s3 + $0xb0] sm:$0xf]
  %v611 = vld [vmem:[%s3 + $0xb4] sm:$0xf]
  %v612 = vld [vmem:[%s3 + $0xb8] sm:$0xf]
  %v613 = vld [vmem:[%s3 + $0xbc] sm:$0xf]
  %v614 = vld [vmem:[%s4] sm:$0x1]
  %v616 = vlaneseq
  %v617 = vshrl.u32 %v616, 7
  %v618 = vsub.s32 0, %v617
  %v619 = vrot.slane %v614, %v618
  %v669 = vunpack.c.l.b16 %v566
  %v670 = vunpack.c.l.b16 %v567
  %v671 = vunpack.c.l.b16 %v568
  %v672 = vunpack.c.l.b16 %v569
  %v673 = vunpack.c.l.b16 %v570
  %v674 = vunpack.c.l.b16 %v571
  %v675 = vunpack.c.l.b16 %v572
  %v676 = vunpack.c.l.b16 %v573
  %v677 = vunpack.c.l.b16 %v574
  %v678 = vunpack.c.l.b16 %v575
  %v679 = vunpack.c.l.b16 %v576
  %v680 = vunpack.c.l.b16 %v577
  %v681 = vunpack.c.l.b16 %v578
  %v682 = vunpack.c.l.b16 %v579
  %v683 = vunpack.c.l.b16 %v580
  %v684 = vunpack.c.l.b16 %v581
  %v685 = vunpack.c.l.b16 %v582
  %v686 = vunpack.c.l.b16 %v583
  %v687 = vunpack.c.l.b16 %v584
  %v688 = vunpack.c.l.b16 %v585
  %v689 = vunpack.c.l.b16 %v586
  %v690 = vunpack.c.l.b16 %v587
  %v691 = vunpack.c.l.b16 %v588
  %v692 = vunpack.c.l.b16 %v589
  %v693 = vunpack.c.l.b16 %v590
  %v694 = vunpack.c.l.b16 %v591
  %v695 = vunpack.c.l.b16 %v592
  %v696 = vunpack.c.l.b16 %v593
  %v697 = vunpack.c.l.b16 %v594
  %v698 = vunpack.c.l.b16 %v595
  %v699 = vunpack.c.l.b16 %v596
  %v700 = vunpack.c.l.b16 %v597
  %v701 = vunpack.c.l.b16 %v598
  %v702 = vunpack.c.l.b16 %v599
  %v703 = vunpack.c.l.b16 %v600
  %v704 = vunpack.c.l.b16 %v601
  %v705 = vunpack.c.l.b16 %v602
  %v706 = vunpack.c.l.b16 %v603
  %v707 = vunpack.c.l.b16 %v604
  %v708 = vunpack.c.l.b16 %v605
  %v709 = vunpack.c.l.b16 %v606
  %v710 = vunpack.c.l.b16 %v607
  %v711 = vunpack.c.l.b16 %v608
  %v712 = vunpack.c.l.b16 %v609
  %v713 = vunpack.c.l.b16 %v610
  %v714 = vunpack.c.l.b16 %v611
  %v715 = vunpack.c.l.b16 %v612
  %v716 = vunpack.c.l.b16 %v613
  %v717 = vpack.c.b16 %v670, %v669
  %v718 = vpack.c.b16 %v672, %v671
  %v719 = vpack.c.b16 %v674, %v673
  %v720 = vpack.c.b16 %v676, %v675
  %v721 = vpack.c.b16 %v678, %v677
  %v722 = vpack.c.b16 %v680, %v679
  %v723 = vpack.c.b16 %v682, %v681
  %v724 = vpack.c.b16 %v684, %v683
  %v725 = vpack.c.b16 %v686, %v685
  %v726 = vpack.c.b16 %v688, %v687
  %v727 = vpack.c.b16 %v690, %v689
  %v728 = vpack.c.b16 %v692, %v691
  %v729 = vpack.c.b16 %v694, %v693
  %v730 = vpack.c.b16 %v696, %v695
  %v731 = vpack.c.b16 %v698, %v697
  %v732 = vpack.c.b16 %v700, %v699
  %v733 = vpack.c.b16 %v702, %v701
  %v734 = vpack.c.b16 %v704, %v703
  %v735 = vpack.c.b16 %v706, %v705
  %v736 = vpack.c.b16 %v708, %v707
  %v737 = vpack.c.b16 %v710, %v709
  %v738 = vpack.c.b16 %v712, %v711
  %v739 = vpack.c.b16 %v714, %v713
  %v740 = vpack.c.b16 %v716, %v715
  %765 = vmatprep.subr.bf16.mxu0 0
  %766 = vmatpush1.bf16.msra.mxu0 %v717
  %767 = vmatprep.subr.bf16.mxu0 0
  %768 = vmatpush1.bf16.msra.mxu0 %v718
  %769 = vmatprep.subr.bf16.mxu0 0
  %770 = vmatpush1.bf16.msra.mxu0 %v719
  %771 = vmatprep.subr.bf16.mxu0 0
  %772 = vmatpush1.bf16.msra.mxu0 %v720
  %773 = vmatprep.subr.bf16.mxu0 0
  %774 = vmatpush1.bf16.msra.mxu0 %v721
  %775 = vmatprep.subr.bf16.mxu0 0
  %776 = vmatpush1.bf16.msra.mxu0 %v722
  %777 = vmatprep.subr.bf16.mxu0 0
  %778 = vmatpush1.bf16.msra.mxu0 %v723
  %779 = vmatprep.subr.bf16.mxu0 0
  %780 = vmatpush1.bf16.msra.mxu0 %v724
  %781 = vmatprep.subr.bf16.mxu0 0
  %782 = vmatpush1.bf16.msra.mxu0 %v725
  %783 = vmatprep.subr.bf16.mxu0 0
  %784 = vmatpush1.bf16.msra.mxu0 %v726
  %785 = vmatprep.subr.bf16.mxu0 0
  %786 = vmatpush1.bf16.msra.mxu0 %v727
  %787 = vmatprep.subr.bf16.mxu0 0
  %788 = vmatpush1.bf16.msra.mxu0 %v728
  %789 = vmatprep.subr.bf16.mxu0 0
  %790 = vmatpush1.bf16.msra.mxu0 %v729
  %791 = vmatprep.subr.bf16.mxu0 0
  %792 = vmatpush1.bf16.msra.mxu0 %v730
  %793 = vmatprep.subr.bf16.mxu0 0
  %794 = vmatpush1.bf16.msra.mxu0 %v731
  %795 = vmatprep.subr.bf16.mxu0 0
  %796 = vmatpush1.bf16.msra.mxu0 %v732
  %797 = vmatprep.mubr.bf16.mxu0 %v561
  %798 = vmatmul.mubr.bf16.gmra.mrb[0].mxu0 %v560
  %v799 = vpop.f32.mrb[0].mxu0
  %v800 = vadd.f32 %v619, %v799
  %v801 = vpop.f32.mrb[0].mxu0
  %v802 = vpop.f32.mrb[0].mxu0
  %v803 = vadd.f32 %v619, %v802
  %v804 = vpop.f32.mrb[0].mxu0
  %805 = vmatprep.mubr.bf16.mxu0 %v564
  %806 = vmatmul.mubr.bf16.gmra.mrb[0].mxu0 %v563
  %v807 = vpop.f32.mrb[0].mxu0
  %v808 = vadd.f32 %v619, %v807
  %v809 = vpop.f32.mrb[0].mxu0
  %v810 = vpop.f32.mrb[0].mxu0
  %v811 = vadd.f32 %v619, %v810
  %v812 = vpop.f32.mrb[0].mxu0
  %813 = vdwg.mxu0
  %814 = vmatprep.subr.bf16.mxu0 0
  %815 = vmatpush1.bf16.msra.mxu0 %v733
  %816 = vmatprep.subr.bf16.mxu0 0
  %817 = vmatpush1.bf16.msra.mxu0 %v734
  %818 = vmatprep.subr.bf16.mxu0 0
  %819 = vmatpush1.bf16.msra.mxu0 %v735
  %820 = vmatprep.subr.bf16.mxu0 0
  %821 = vmatpush1.bf16.msra.mxu0 %v736
  %822 = vmatprep.subr.bf16.mxu0 0
  %823 = vmatpush1.bf16.msra.mxu0 %v737
  %824 = vmatprep.subr.bf16.mxu0 0
  %825 = vmatpush1.bf16.msra.mxu0 %v738
  %826 = vmatprep.subr.bf16.mxu0 0
  %827 = vmatpush1.bf16.msra.mxu0 %v739
  %828 = vmatprep.subr.bf16.mxu0 0
  %829 = vmatpush1.bf16.msra.mxu0 %v740
  %830 = vmatprep.subr.bf16.mxu0 0
  %831 = vmatpush1.bf16.msra.mxu0 0
  %832 = vmatprep.subr.bf16.mxu0 0
  %833 = vmatpush1.bf16.msra.mxu0 0
  %834 = vmatprep.subr.bf16.mxu0 0
  %835 = vmatpush1.bf16.msra.mxu0 0
  %836 = vmatprep.subr.bf16.mxu0 0
  %837 = vmatpush1.bf16.msra.mxu0 0
  %838 = vmatprep.subr.bf16.mxu0 0
  %839 = vmatpush1.bf16.msra.mxu0 0
  %840 = vmatprep.subr.bf16.mxu0 0
  %841 = vmatpush1.bf16.msra.mxu0 0
  %842 = vmatprep.subr.bf16.mxu0 0
  %843 = vmatpush1.bf16.msra.mxu0 0
  %844 = vmatprep.subr.bf16.mxu0 0
  %845 = vmatpush1.bf16.msra.mxu0 0
  %846 = vmatprep.mubr.bf16.mxu0 0
  %847 = vmatmul.mubr.bf16.gmra.mrb[0].mxu0 %v562
  %v848 = vpop.f32.mrb[0].mxu0
  %v849 = vadd.f32 %v800, %v848
  %v850 = vpop.f32.mrb[0].mxu0
  %v851 = vpop.f32.mrb[0].mxu0
  %v852 = vadd.f32 %v803, %v851
  %v853 = vpop.f32.mrb[0].mxu0
  %854 = vmatprep.mubr.bf16.mxu0 0
  %855 = vmatmul.mubr.bf16.gmra.mrb[0].mxu0 %v565
  %v856 = vpop.f32.mrb[0].mxu0
  %v857 = vadd.f32 %v808, %v856
  %v858 = vpop.f32.mrb[0].mxu0
  %v859 = vpop.f32.mrb[0].mxu0
  %v860 = vadd.f32 %v811, %v859
  %v861 = vpop.f32.mrb[0].mxu0
  %862 = vdwg.mxu0
  %v863 = vmax.f32 %v849, 0.0
  %v864 = vmax.f32 %v852, 0.0
  %v865 = vmax.f32 %v857, 0.0
  %v866 = vmax.f32 %v860, 0.0
  %867 = vst [vmem:[#allocation3] sm:$0xff] %v863
  %868 = vst [vmem:[#allocation3 + $0x8] sm:$0xff] %v864
  %869 = vst [vmem:[#allocation3 + $0x10] sm:$0xff] %v865
  %870 = vst [vmem:[#allocation3 + $0x18] sm:$0xff] %v866
  %v871 = vld [vmem:[#allocation3] ss:$2 sm:$0xff]
  %s872 = scalar_lea.vmem [#allocation3], 16
  %v873 = vld [vmem:[%s872] ss:$2 sm:$0xff]
  %s874 = scalar_lea.vmem [#allocation3], 1
  %v875 = vld [vmem:[%s874] ss:$2 sm:$0xff]
  %s876 = scalar_lea.vmem [#allocation3], 17
  %v877 = vld [vmem:[%s876] ss:$2 sm:$0xff]
  %v878 = vmax.f32 %v871, %v875
  %v879 = vmax.f32 %v873, %v877
  %882 = vrot.lane.b32.xlu0 %v878, 112
  %v883 = vpop.permute.xlu0 %882
  %884 = vrot.lane.b32.xlu0 %v879, 112
  %v885 = vpop.permute.xlu0 %884
  %v888 = vmax.f32 %v878, %v883
  %v889 = vmax.f32 %v879, %v885
  %890 = vst [vmem:[#allocation4] sm:$0xff] %v888
  %891 = vst [vmem:[#allocation4 + $0x8] sm:$0xff] %v889
  %v892 = vld [vmem:[#allocation4] ss:$4 sm:$0xf]
  %s893 = scalar_lea.vmem [#allocation4], 1
  %v894 = vld [vmem:[%s893] ss:$4 sm:$0xf]
  %s895 = scalar_lea.vmem [#allocation4], 2
  %v896 = vld [vmem:[%s895] ss:$4 sm:$0xf]
  %s897 = scalar_lea.vmem [#allocation4], 3
  %v898 = vld [vmem:[%s897] ss:$4 sm:$0xf]
  %v899 = vpack.c.bf16 %v892, %v892
  %v900 = vpack.c.bf16 %v894, %v894
  %v901 = vpack.c.bf16 %v896, %v896
  %v902 = vpack.c.bf16 %v898, %v898
  %v903 = vld [vmem:[%s5] sm:$0xf]
  %v904 = vld [vmem:[%s5 + $0x4] sm:$0xf]
  %v905 = vld [vmem:[%s5 + $0x8] sm:$0xf]
  %v906 = vld [vmem:[%s5 + $0xc] sm:$0xf]
  %v907 = vld [vmem:[%s5 + $0x10] sm:$0xf]
  %v908 = vld [vmem:[%s5 + $0x14] sm:$0xf]
  %v909 = vld [vmem:[%s5 + $0x18] sm:$0xf]
  %v910 = vld [vmem:[%s5 + $0x1c] sm:$0xf]
  %v911 = vld [vmem:[%s5 + $0x20] sm:$0xf]
  %v912 = vld [vmem:[%s5 + $0x24] sm:$0xf]
  %v913 = vld [vmem:[%s5 + $0x28] sm:$0xf]
  %v914 = vld [vmem:[%s5 + $0x2c] sm:$0xf]
  %v915 = vld [vmem:[%s5 + $0x30] sm:$0xf]
  %v916 = vld [vmem:[%s5 + $0x34] sm:$0xf]
  %v917 = vld [vmem:[%s5 + $0x38] sm:$0xf]
  %v918 = vld [vmem:[%s5 + $0x3c] sm:$0xf]
  %v919 = vld [vmem:[%s5 + $0x40] sm:$0xf]
  %v920 = vld [vmem:[%s5 + $0x44] sm:$0xf]
  %v921 = vld [vmem:[%s5 + $0x48] sm:$0xf]
  %v922 = vld [vmem:[%s5 + $0x4c] sm:$0xf]
  %v923 = vld [vmem:[%s5 + $0x50] sm:$0xf]
  %v924 = vld [vmem:[%s5 + $0x54] sm:$0xf]
  %v925 = vld [vmem:[%s5 + $0x58] sm:$0xf]
  %v926 = vld [vmem:[%s5 + $0x5c] sm:$0xf]
  %v927 = vld [vmem:[%s5 + $0x60] sm:$0xf]
  %v928 = vld [vmem:[%s5 + $0x64] sm:$0xf]
  %v929 = vld [vmem:[%s5 + $0x68] sm:$0xf]
  %v930 = vld [vmem:[%s5 + $0x6c] sm:$0xf]
  %v931 = vld [vmem:[%s5 + $0x70] sm:$0xf]
  %v932 = vld [vmem:[%s5 + $0x74] sm:$0xf]
  %v933 = vld [vmem:[%s5 + $0x78] sm:$0xf]
  %v934 = vld [vmem:[%s5 + $0x7c] sm:$0xf]
  %v935 = vld [vmem:[%s5 + $0x80] sm:$0xf]
  %v936 = vld [vmem:[%s5 + $0x84] sm:$0xf]
  %v937 = vld [vmem:[%s5 + $0x88] sm:$0xf]
  %v938 = vld [vmem:[%s5 + $0x8c] sm:$0xf]
  %v939 = vld [vmem:[%s5 + $0x90] sm:$0xf]
  %v940 = vld [vmem:[%s5 + $0x94] sm:$0xf]
  %v941 = vld [vmem:[%s5 + $0x98] sm:$0xf]
  %v942 = vld [vmem:[%s5 + $0x9c] sm:$0xf]
  %v943 = vld [vmem:[%s5 + $0xa0] sm:$0xf]
  %v944 = vld [vmem:[%s5 + $0xa4] sm:$0xf]
  %v945 = vld [vmem:[%s5 + $0xa8] sm:$0xf]
  %v946 = vld [vmem:[%s5 + $0xac] sm:$0xf]
  %v947 = vld [vmem:[%s5 + $0xb0] sm:$0xf]
  %v948 = vld [vmem:[%s5 + $0xb4] sm:$0xf]
  %v949 = vld [vmem:[%s5 + $0xb8] sm:$0xf]
  %v950 = vld [vmem:[%s5 + $0xbc] sm:$0xf]
  %v951 = vld [vmem:[%s5 + $0xc0] sm:$0xf]
  %v952 = vld [vmem:[%s5 + $0xc4] sm:$0xf]
  %v953 = vld [vmem:[%s5 + $0xc8] sm:$0xf]
  %v954 = vld [vmem:[%s5 + $0xcc] sm:$0xf]
  %v955 = vld [vmem:[%s5 + $0xd0] sm:$0xf]
  %v956 = vld [vmem:[%s5 + $0xd4] sm:$0xf]
  %v957 = vld [vmem:[%s5 + $0xd8] sm:$0xf]
  %v958 = vld [vmem:[%s5 + $0xdc] sm:$0xf]
  %v959 = vld [vmem:[%s5 + $0xe0] sm:$0xf]
  %v960 = vld [vmem:[%s5 + $0xe4] sm:$0xf]
  %v961 = vld [vmem:[%s5 + $0xe8] sm:$0xf]
  %v962 = vld [vmem:[%s5 + $0xec] sm:$0xf]
  %v963 = vld [vmem:[%s5 + $0xf0] sm:$0xf]
  %v964 = vld [vmem:[%s5 + $0xf4] sm:$0xf]
  %v965 = vld [vmem:[%s5 + $0xf8] sm:$0xf]
  %v966 = vld [vmem:[%s5 + $0xfc] sm:$0xf]
  %v967 = vld [vmem:[%s6] sm:$0x1]
  %v969 = vlaneseq
  %v970 = vshrl.u32 %v969, 7
  %v971 = vsub.s32 0, %v970
  %v972 = vrot.slane %v967, %v971
  %v1038 = vunpack.c.l.b16 %v903
  %v1039 = vunpack.c.l.b16 %v904
  %v1040 = vunpack.c.l.b16 %v905
  %v1041 = vunpack.c.l.b16 %v906
  %v1042 = vunpack.c.l.b16 %v907
  %v1043 = vunpack.c.l.b16 %v908
  %v1044 = vunpack.c.l.b16 %v909
  %v1045 = vunpack.c.l.b16 %v910
  %v1046 = vunpack.c.l.b16 %v911
  %v1047 = vunpack.c.l.b16 %v912
  %v1048 = vunpack.c.l.b16 %v913
  %v1049 = vunpack.c.l.b16 %v914
  %v1050 = vunpack.c.l.b16 %v915
  %v1051 = vunpack.c.l.b16 %v916
  %v1052 = vunpack.c.l.b16 %v917
  %v1053 = vunpack.c.l.b16 %v918
  %v1054 = vunpack.c.l.b16 %v919
  %v1055 = vunpack.c.l.b16 %v920
  %v1056 = vunpack.c.l.b16 %v921
  %v1057 = vunpack.c.l.b16 %v922
  %v1058 = vunpack.c.l.b16 %v923
  %v1059 = vunpack.c.l.b16 %v924
  %v1060 = vunpack.c.l.b16 %v925
  %v1061 = vunpack.c.l.b16 %v926
  %v1062 = vunpack.c.l.b16 %v927
  %v1063 = vunpack.c.l.b16 %v928
  %v1064 = vunpack.c.l.b16 %v929
  %v1065 = vunpack.c.l.b16 %v930
  %v1066 = vunpack.c.l.b16 %v931
  %v1067 = vunpack.c.l.b16 %v932
  %v1068 = vunpack.c.l.b16 %v933
  %v1069 = vunpack.c.l.b16 %v934
  %v1070 = vunpack.c.l.b16 %v935
  %v1071 = vunpack.c.l.b16 %v936
  %v1072 = vunpack.c.l.b16 %v937
  %v1073 = vunpack.c.l.b16 %v938
  %v1074 = vunpack.c.l.b16 %v939
  %v1075 = vunpack.c.l.b16 %v940
  %v1076 = vunpack.c.l.b16 %v941
  %v1077 = vunpack.c.l.b16 %v942
  %v1078 = vunpack.c.l.b16 %v943
  %v1079 = vunpack.c.l.b16 %v944
  %v1080 = vunpack.c.l.b16 %v945
  %v1081 = vunpack.c.l.b16 %v946
  %v1082 = vunpack.c.l.b16 %v947
  %v1083 = vunpack.c.l.b16 %v948
  %v1084 = vunpack.c.l.b16 %v949
  %v1085 = vunpack.c.l.b16 %v950
  %v1086 = vunpack.c.l.b16 %v951
  %v1087 = vunpack.c.l.b16 %v952
  %v1088 = vunpack.c.l.b16 %v953
  %v1089 = vunpack.c.l.b16 %v954
  %v1090 = vunpack.c.l.b16 %v955
  %v1091 = vunpack.c.l.b16 %v956
  %v1092 = vunpack.c.l.b16 %v957
  %v1093 = vunpack.c.l.b16 %v958
  %v1094 = vunpack.c.l.b16 %v959
  %v1095 = vunpack.c.l.b16 %v960
  %v1096 = vunpack.c.l.b16 %v961
  %v1097 = vunpack.c.l.b16 %v962
  %v1098 = vunpack.c.l.b16 %v963
  %v1099 = vunpack.c.l.b16 %v964
  %v1100 = vunpack.c.l.b16 %v965
  %v1101 = vunpack.c.l.b16 %v966
  %v1102 = vpack.c.b16 %v1039, %v1038
  %v1103 = vpack.c.b16 %v1041, %v1040
  %v1104 = vpack.c.b16 %v1043, %v1042
  %v1105 = vpack.c.b16 %v1045, %v1044
  %v1106 = vpack.c.b16 %v1047, %v1046
  %v1107 = vpack.c.b16 %v1049, %v1048
  %v1108 = vpack.c.b16 %v1051, %v1050
  %v1109 = vpack.c.b16 %v1053, %v1052
  %v1110 = vpack.c.b16 %v1055, %v1054
  %v1111 = vpack.c.b16 %v1057, %v1056
  %v1112 = vpack.c.b16 %v1059, %v1058
  %v1113 = vpack.c.b16 %v1061, %v1060
  %v1114 = vpack.c.b16 %v1063, %v1062
  %v1115 = vpack.c.b16 %v1065, %v1064
  %v1116 = vpack.c.b16 %v1067, %v1066
  %v1117 = vpack.c.b16 %v1069, %v1068
  %v1118 = vpack.c.b16 %v1071, %v1070
  %v1119 = vpack.c.b16 %v1073, %v1072
  %v1120 = vpack.c.b16 %v1075, %v1074
  %v1121 = vpack.c.b16 %v1077, %v1076
  %v1122 = vpack.c.b16 %v1079, %v1078
  %v1123 = vpack.c.b16 %v1081, %v1080
  %v1124 = vpack.c.b16 %v1083, %v1082
  %v1125 = vpack.c.b16 %v1085, %v1084
  %v1126 = vpack.c.b16 %v1087, %v1086
  %v1127 = vpack.c.b16 %v1089, %v1088
  %v1128 = vpack.c.b16 %v1091, %v1090
  %v1129 = vpack.c.b16 %v1093, %v1092
  %v1130 = vpack.c.b16 %v1095, %v1094
  %v1131 = vpack.c.b16 %v1097, %v1096
  %v1132 = vpack.c.b16 %v1099, %v1098
  %v1133 = vpack.c.b16 %v1101, %v1100
  %1166 = vmatprep.subr.bf16.mxu0 0
  %1167 = vmatpush1.bf16.msra.mxu0 %v1102
  %1168 = vmatprep.subr.bf16.mxu0 0
  %1169 = vmatpush1.bf16.msra.mxu0 %v1103
  %1170 = vmatprep.subr.bf16.mxu0 0
  %1171 = vmatpush1.bf16.msra.mxu0 %v1104
  %1172 = vmatprep.subr.bf16.mxu0 0
  %1173 = vmatpush1.bf16.msra.mxu0 %v1105
  %1174 = vmatprep.subr.bf16.mxu0 0
  %1175 = vmatpush1.bf16.msra.mxu0 %v1106
  %1176 = vmatprep.subr.bf16.mxu0 0
  %1177 = vmatpush1.bf16.msra.mxu0 %v1107
  %1178 = vmatprep.subr.bf16.mxu0 0
  %1179 = vmatpush1.bf16.msra.mxu0 %v1108
  %1180 = vmatprep.subr.bf16.mxu0 0
  %1181 = vmatpush1.bf16.msra.mxu0 %v1109
  %1182 = vmatprep.subr.bf16.mxu0 0
  %1183 = vmatpush1.bf16.msra.mxu0 %v1110
  %1184 = vmatprep.subr.bf16.mxu0 0
  %1185 = vmatpush1.bf16.msra.mxu0 %v1111
  %1186 = vmatprep.subr.bf16.mxu0 0
  %1187 = vmatpush1.bf16.msra.mxu0 %v1112
  %1188 = vmatprep.subr.bf16.mxu0 0
  %1189 = vmatpush1.bf16.msra.mxu0 %v1113
  %1190 = vmatprep.subr.bf16.mxu0 0
  %1191 = vmatpush1.bf16.msra.mxu0 %v1114
  %1192 = vmatprep.subr.bf16.mxu0 0
  %1193 = vmatpush1.bf16.msra.mxu0 %v1115
  %1194 = vmatprep.subr.bf16.mxu0 0
  %1195 = vmatpush1.bf16.msra.mxu0 %v1116
  %1196 = vmatprep.subr.bf16.mxu0 0
  %1197 = vmatpush1.bf16.msra.mxu0 %v1117
  %1198 = vmatprep.mubr.bf16.mxu0 %v900
  %1199 = vmatmul.mubr.bf16.gmra.mrb[0].mxu0 %v899
  %v1200 = vpop.f32.mrb[0].mxu0
  %v1201 = vadd.f32 %v972, %v1200
  %v1202 = vpop.f32.mrb[0].mxu0
  %v1203 = vpop.f32.mrb[0].mxu0
  %v1204 = vpop.f32.mrb[0].mxu0
  %1205 = vdwg.mxu0
  %1206 = vmatprep.subr.bf16.mxu0 0
  %1207 = vmatpush1.bf16.msra.mxu0 %v1118
  %1208 = vmatprep.subr.bf16.mxu0 0
  %1209 = vmatpush1.bf16.msra.mxu0 %v1119
  %1210 = vmatprep.subr.bf16.mxu0 0
  %1211 = vmatpush1.bf16.msra.mxu0 %v1120
  %1212 = vmatprep.subr.bf16.mxu0 0
  %1213 = vmatpush1.bf16.msra.mxu0 %v1121
  %1214 = vmatprep.subr.bf16.mxu0 0
  %1215 = vmatpush1.bf16.msra.mxu0 %v1122
  %1216 = vmatprep.subr.bf16.mxu0 0
  %1217 = vmatpush1.bf16.msra.mxu0 %v1123
  %1218 = vmatprep.subr.bf16.mxu0 0
  %1219 = vmatpush1.bf16.msra.mxu0 %v1124
  %1220 = vmatprep.subr.bf16.mxu0 0
  %1221 = vmatpush1.bf16.msra.mxu0 %v1125
  %1222 = vmatprep.subr.bf16.mxu0 0
  %1223 = vmatpush1.bf16.msra.mxu0 %v1126
  %1224 = vmatprep.subr.bf16.mxu0 0
  %1225 = vmatpush1.bf16.msra.mxu0 %v1127
  %1226 = vmatprep.subr.bf16.mxu0 0
  %1227 = vmatpush1.bf16.msra.mxu0 %v1128
  %1228 = vmatprep.subr.bf16.mxu0 0
  %1229 = vmatpush1.bf16.msra.mxu0 %v1129
  %1230 = vmatprep.subr.bf16.mxu0 0
  %1231 = vmatpush1.bf16.msra.mxu0 %v1130
  %1232 = vmatprep.subr.bf16.mxu0 0
  %1233 = vmatpush1.bf16.msra.mxu0 %v1131
  %1234 = vmatprep.subr.bf16.mxu0 0
  %1235 = vmatpush1.bf16.msra.mxu0 %v1132
  %1236 = vmatprep.subr.bf16.mxu0 0
  %1237 = vmatpush1.bf16.msra.mxu0 %v1133
  %1238 = vmatprep.mubr.bf16.mxu0 %v902
  %1239 = vmatmul.mubr.bf16.gmra.mrb[0].mxu0 %v901
  %v1240 = vpop.f32.mrb[0].mxu0
  %v1241 = vadd.f32 %v1201, %v1240
  %v1242 = vpop.f32.mrb[0].mxu0
  %v1243 = vpop.f32.mrb[0].mxu0
  %v1244 = vpop.f32.mrb[0].mxu0
  %1245 = vdwg.mxu0
  %v1246 = vmax.f32 %v1241, 0.0
  %v1247 = vpack.c.bf16 %v1246, %v1246
  %v1248 = vld [vmem:[%s7] sm:$0xf]
  %v1249 = vld [vmem:[%s7 + $0x4] sm:$0xf]
  %v1250 = vld [vmem:[%s7 + $0x8] sm:$0xf]
  %v1251 = vld [vmem:[%s7 + $0xc] sm:$0xf]
  %v1252 = vld [vmem:[%s7 + $0x10] sm:$0xf]
  %v1253 = vld [vmem:[%s7 + $0x14] sm:$0xf]
  %v1254 = vld [vmem:[%s7 + $0x18] sm:$0xf]
  %v1255 = vld [vmem:[%s7 + $0x1c] sm:$0xf]
  %v1256 = vld [vmem:[%s8] sm:$0x1]
  %v1258 = vlaneseq
  %v1259 = vshrl.u32 %v1258, 7
  %v1260 = vsub.s32 0, %v1259
  %v1261 = vrot.slane %v1256, %v1260
  %v1271 = vunpack.c.l.b16 %v1248
  %v1272 = vunpack.c.l.b16 %v1249
  %v1273 = vunpack.c.l.b16 %v1250
  %v1274 = vunpack.c.l.b16 %v1251
  %v1275 = vunpack.c.l.b16 %v1252
  %v1276 = vunpack.c.l.b16 %v1253
  %v1277 = vunpack.c.l.b16 %v1254
  %v1278 = vunpack.c.l.b16 %v1255
  %v1279 = vpack.c.b16 %v1272, %v1271
  %v1280 = vpack.c.b16 %v1274, %v1273
  %v1281 = vpack.c.b16 %v1276, %v1275
  %v1282 = vpack.c.b16 %v1278, %v1277
  %vm1287 = vcmask 523264
  %v1289 = vsel %vm1287, %v1247, 0
  %1291 = vmatprep.subr.bf16.mxu0 0
  %1292 = vmatpush1.bf16.msra.mxu0 %v1279
  %1293 = vmatprep.subr.bf16.mxu0 0
  %1294 = vmatpush1.bf16.msra.mxu0 %v1280
  %1295 = vmatprep.subr.bf16.mxu0 0
  %1296 = vmatpush1.bf16.msra.mxu0 %v1281
  %1297 = vmatprep.subr.bf16.mxu0 0
  %1298 = vmatpush1.bf16.msra.mxu0 %v1282
  %1299 = vmatprep.subr.bf16.mxu0 0
  %1300 = vmatpush1.bf16.msra.mxu0 0
  %1301 = vmatprep.subr.bf16.mxu0 0
  %1302 = vmatpush1.bf16.msra.mxu0 0
  %1303 = vmatprep.subr.bf16.mxu0 0
  %1304 = vmatpush1.bf16.msra.mxu0 0
  %1305 = vmatprep.subr.bf16.mxu0 0
  %1306 = vmatpush1.bf16.msra.mxu0 0
  %1307 = vmatprep.subr.bf16.mxu0 0
  %1308 = vmatpush1.bf16.msra.mxu0 0
  %1309 = vmatprep.subr.bf16.mxu0 0
  %1310 = vmatpush1.bf16.msra.mxu0 0
  %1311 = vmatprep.subr.bf16.mxu0 0
  %1312 = vmatpush1.bf16.msra.mxu0 0
  %1313 = vmatprep.subr.bf16.mxu0 0
  %1314 = vmatpush1.bf16.msra.mxu0 0
  %1315 = vmatprep.subr.bf16.mxu0 0
  %1316 = vmatpush1.bf16.msra.mxu0 0
  %1317 = vmatprep.subr.bf16.mxu0 0
  %1318 = vmatpush1.bf16.msra.mxu0 0
  %1319 = vmatprep.subr.bf16.mxu0 0
  %1320 = vmatpush1.bf16.msra.mxu0 0
  %1321 = vmatprep.subr.bf16.mxu0 0
  %1322 = vmatpush1.bf16.msra.mxu0 0
  %1323 = vmatprep.mubr.bf16.mxu0 0
  %1324 = vmatmul.mubr.bf16.gmra.mrb[0].mxu0 %v1289
  %v1325 = vpop.f32.mrb[0].mxu0
  %v1326 = vadd.f32 %v1261, %v1325
  %v1327 = vpop.f32.mrb[0].mxu0
  %v1328 = vpop.f32.mrb[0].mxu0
  %v1329 = vpop.f32.mrb[0].mxu0
  %1330 = vdwg.mxu0
  %vm1331 = vcmask 257024
  %1332 = vst.msk [vmem:[%s9] sm:$0xf] %vm1331, %v1326
  // Predicated region
  $region38: #{face_siamese_net.1} parent=0 // pred_check
    _
  $region39: #{face_siamese_net.1} parent=0 // pred_check_branch
    %1334 = sbr.rel (0) target = $region41
  $region40: #{face_siamese_net.1} parent=0 // pred_region
    _
  $region41: #{face_siamese_net.1} parent=0 // pred_fallthru
    _
  // Predicated region
  $region42: #{face_siamese_net.1} parent=0 // pred_check
    _
  $region43: #{face_siamese_net.1} parent=0 // pred_check_branch
    %1336 = sbr.rel (0) target = $region45
  $region44: #{face_siamese_net.1} parent=0 // pred_region
    _
  $region45: #{face_siamese_net.1} parent=0 // pred_fallthru
    _

</llo_original>
